<compile_context>
chip_gen: v7x
topology: tpu7x:2x2x1
jax: 0.10.0
libtpu: 0.0.40
codegen_flags: <defaults>
</compile_context>

<pallas_src>
import functools

import jax
import jax.numpy as jnp
from jax.experimental import pallas as pl
from jax.experimental.pallas import tpu as pltpu


def _round_up(x, m):
    return (x + m - 1) // m * m


def _cdiv(a, b):
    return -(-a // b)


def _vmem_budgets():
    """Generation-aware (vmem_limit_bytes, tile_budget_bytes).

    v5e/v6e: 128 MiB physical VMEM per core -> 100/80 MiB.
    v7x:      64 MiB                         -> 48/40 MiB (also the fallback).
    """
    try:
        phys = int(pltpu.get_tpu_info().vmem_capacity_bytes)
    except Exception:
        phys = 64 * 1024 * 1024
    if phys >= 100 * 1024 * 1024:
        return 100 * 1024 * 1024, 80 * 1024 * 1024
    return 48 * 1024 * 1024, 40 * 1024 * 1024


def _pick_spatial_tile(hw128, c_in, c_out_pad, max_c_i, in_itemsize, out_itemsize,
                       budget_bytes, max_tile=4096):
    """Largest multiple-of-128 spatial tile whose *real* working set fits the budget.

    Counts: double-buffered activation tiles, double-buffered output tiles, the f32
    accumulator scratch, the f32 dot-result temporary consumed by `+=`, and one bf16
    cast temporary.  Weights/bias are single-buffered residents (no 2x factor).
    """
    fixed = c_in * c_out_pad * 2 + c_out_pad * 4          # resident bf16 slabs + f32 bias
    per_lane = (2 * c_in * in_itemsize                    # activation tiles (x2 buffers)
                + 2 * c_out_pad * out_itemsize            # output tiles (x2 buffers)
                + c_out_pad * 4                           # f32 accumulator scratch
                + c_out_pad * 4                           # dot-result temp before `+=`
                + max_c_i * 2)                            # bf16 cast temp for one slab
    avail = budget_bytes - fixed
    if avail < 128 * per_lane:
        # TODO(synk): add a K grid axis ("arbitrary", last) that streams channel chunks
        # through the f32 accumulator scratch so huge weights need not be VMEM-resident.
        raise ValueError(
            f"MLPDecoderPallas: resident weights ({fixed} B) leave only {avail} B of the "
            f"{budget_bytes} B VMEM budget; not enough for a 128-lane tile and the "
            f"K-tiling fallback is not implemented.")
    t = min(avail // per_lane // 128 * 128, max_tile, hw128)
    return int(max(t, 128))


def _mlp_decoder_kernel(*refs, n_inputs):
    # refs = (w_0..w_{n-1}, bias, x_0..x_{n-1}, out, acc)
    #   w_i  : (C_out_pad, C_i)   bf16 weight slab, VMEM-resident (DMA'd once)
    #   bias : (C_out_pad, 1)     f32, VMEM-resident
    #   x_i  : (C_i, T_hw)        activation tile (batch dim squeezed)
    #   out  : (C_out_pad, T_hw)  lane-dense output tile
    #   acc  : (C_out_pad, T_hw)  f32 accumulator scratch
    w_refs = refs[:n_inputs]
    b_ref = refs[n_inputs]
    x_refs = refs[n_inputs + 1:2 * n_inputs + 1]
    o_ref = refs[2 * n_inputs + 1]
    acc_ref = refs[2 * n_inputs + 2]

    acc_ref[...] = jnp.dot(w_refs[0][...], x_refs[0][...].astype(jnp.bfloat16),
                           preferred_element_type=jnp.float32)
    for i in range(1, n_inputs):
        acc_ref[...] += jnp.dot(w_refs[i][...], x_refs[i][...].astype(jnp.bfloat16),
                                preferred_element_type=jnp.float32)
    # Bias-add + ReLU on the f32 accumulator, single downcast on the way out.
    o_ref[...] = jnp.maximum(acc_ref[...] + b_ref[...], 0.0).astype(o_ref.dtype)


def _linear_relu_nchw(w_slabs, bias2d, xs, *, t_hw, out_dtype, vmem_limit_bytes):
    """xs[i]: (B, C_i, HW_pad); w_slabs[i]: (C_out_pad, C_i) bf16; bias2d: (C_out_pad, 1)."""
    n = len(xs)
    B, _, hw_pad = xs[0].shape
    c_out_pad = int(w_slabs[0].shape[0])
    c_in = sum(int(w.shape[1]) for w in w_slabs)
    n_spatial = hw_pad // t_hw

    # Single-buffered residents: whole array placed in VMEM once, no revolving buffer.
    resident = pl.BlockSpec(memory_space=pltpu.MemorySpace.VMEM)
    in_specs = (
        [resident] * n                                   # weight slabs
        + [resident]                                     # bias
        + [pl.BlockSpec((None, int(xi.shape[1]), t_hw), lambda b, s: (b, 0, s))
           for xi in xs]                                 # activation tiles
    )
    out_specs = pl.BlockSpec((None, c_out_pad, t_hw), lambda b, s: (b, 0, s))

    flops = 2 * B * hw_pad * c_in * c_out_pad
    bytes_accessed = (
        sum(int(xi.size) * xi.dtype.itemsize for xi in xs)
        + sum(int(w.size) * w.dtype.itemsize for w in w_slabs)
        + int(bias2d.size) * bias2d.dtype.itemsize
        + B * hw_pad * c_out_pad * jnp.dtype(out_dtype).itemsize
    )

    kernel = functools.partial(_mlp_decoder_kernel, n_inputs=n)
    return pl.pallas_call(
        kernel,
        out_shape=jax.ShapeDtypeStruct((B, c_out_pad, hw_pad), out_dtype),
        grid_spec=pltpu.PrefetchScalarGridSpec(
            num_scalar_prefetch=0,
            grid=(B, n_spatial),
            in_specs=in_specs,
            out_specs=out_specs,
            scratch_shapes=[pltpu.VMEM((c_out_pad, t_hw), jnp.float32)],
        ),
        compiler_params=pltpu.CompilerParams(
            dimension_semantics=("parallel", "parallel"),
            vmem_limit_bytes=vmem_limit_bytes,
        ),
        cost_estimate=pl.CostEstimate(
            flops=flops, transcendentals=0, bytes_accessed=bytes_accessed),
    )(*w_slabs, bias2d, *xs)


class MLPDecoderPallas:
    """JAX/Pallas port of terratorch MLPDecoder (Linear + ReLU on concatenated features)."""

    def __init__(self, embed_dim, channels=100, out_dim=100, activation="ReLU",
                 out_index=-1, key=None, max_spatial_tile=4096, out_dtype=None):
        assert activation == "ReLU", "only ReLU implemented"
        self.embed_dim = list(embed_dim)
        self.dim = out_index
        self.n_inputs = len(self.embed_dim)
        self.out_channels = self.embed_dim[self.dim]
        self.max_spatial_tile = max_spatial_tile
        # None -> follow the input dtype; pass jnp.bfloat16 to halve output HBM
        # traffic on the HBM-bound v6e/v7x regime (f32 accumulate is kept inside).
        self.out_dtype = out_dtype
        in_features = self.out_channels * self.n_inputs
        # The torch module implicitly requires sum(embed_dim) == out_channels * n_inputs.
        assert sum(self.embed_dim) == in_features, "embed dims must sum to Linear in_features"

        # Pad C_out to a sublane-friendly multiple (16 covers f32 and bf16 outputs) so
        # output stores are never sublane-masked; padded rows are sliced off post-call.
        self.c_out_pad = _round_up(self.out_channels, 16)

        key = jax.random.PRNGKey(42) if key is None else key
        kw, kb = jax.random.split(key)
        bound = 1.0 / float(in_features) ** 0.5
        # PyTorch Linear weight is (out, in); generate it directly as (C_out, C_in).
        weight_t = jax.random.uniform(
            kw, (self.out_channels, in_features), jnp.float32, -bound, bound)
        self.bias = jax.random.uniform(
            kb, (self.out_channels,), jnp.float32, -bound, bound)

        weight_pad = jnp.pad(weight_t, ((0, self.c_out_pad - self.out_channels), (0, 0)))
        bias_pad = jnp.pad(self.bias, (0, self.c_out_pad - self.out_channels))

        # Per-input bf16 weight slabs (C_out_pad, C_i): replaces the channel concat.
        # TODO(synk): merge slabs whose C_i < 128 into a neighbour (one wider dot) to avoid
        # MXU K-underfill on v5e's 128-deep array when individual embed dims are tiny.
        slabs, off = [], 0
        for c_i in self.embed_dim:
            slabs.append(weight_pad[:, off:off + c_i].astype(jnp.bfloat16))
            off += c_i
        self.w_slabs = tuple(slabs)
        self.bias2d = bias_pad.reshape(self.c_out_pad, 1)

    def __call__(self, x):
        assert len(x) == self.n_inputs
        B, _, H, W = x[0].shape
        hw = H * W
        c_in = sum(self.embed_dim)
        out_dtype = jnp.dtype(self.out_dtype) if self.out_dtype is not None else x[0].dtype
        in_itemsize = jnp.dtype(x[0].dtype).itemsize
        out_itemsize = jnp.dtype(out_dtype).itemsize

        vmem_limit, vmem_budget = _vmem_budgets()
        hw128 = _round_up(hw, 128)
        t_cand = _pick_spatial_tile(hw128, c_in, self.c_out_pad, max(self.embed_dim),
                                    in_itemsize, out_itemsize, vmem_budget,
                                    max_tile=self.max_spatial_tile)
        # Split the (128-padded) spatial axis into even tiles so padding never wastes
        # nearly a whole tile; <128 dead lanes per tile at worst.
        n_tiles = _cdiv(hw128, t_cand)
        if B == 1 and n_tiles == 1 and hw128 >= 256:
            n_tiles = 2   # give v7x's second TensorCore a grid point on small inputs
        t_hw = _round_up(_cdiv(hw128, n_tiles), 128)
        hw_pad = t_hw * n_tiles

        xs = []
        for xi, c_i in zip(x, self.embed_dim):
            xi = xi.reshape(B, c_i, hw)                       # NCHW flatten: free reshape
            if hw_pad != hw:                                  # bounded one-time pad
                xi = jnp.pad(xi, ((0, 0), (0, 0), (0, hw_pad - hw)))
            xs.append(xi)

        out = _linear_relu_nchw(self.w_slabs, self.bias2d, xs, t_hw=t_hw,
                                out_dtype=out_dtype, vmem_limit_bytes=vmem_limit)
        out = out[:, :self.out_channels, :hw]                 # drop C_out / spatial padding
        return out.reshape(B, self.out_channels, H, W)        # already NCHW


def _reference(x, decoder):
    """Plain-JAX NCHW reference mirroring the kernel's bf16-weight / bf16-activation /
    f32-accumulate numerics (mathematically equal to the torch
    concat -> NHWC -> Linear -> ReLU -> NCHW forward)."""
    c_out = decoder.out_channels
    acc = None
    for xi, wi in zip(x, decoder.w_slabs):
        wi32 = wi[:c_out].astype(jnp.float32)
        xi32 = xi.astype(jnp.bfloat16).astype(jnp.float32)
        part = jnp.einsum("oc,bchw->bohw", wi32, xi32)
        acc = part if acc is None else acc + part
    acc = acc + decoder.bias.reshape(1, -1, 1, 1)
    return jnp.maximum(acc, 0.0)


if __name__ == "__main__":
    key = jax.random.PRNGKey(0)
    k1, k2, kp = jax.random.split(key, 3)

    # Two feature maps with 4 channels each; batch=2, spatial=16x16.
    embed_dim = [4, 4]
    B, H, W = 2, 16, 16
    x = [
        jax.random.normal(k1, (B, embed_dim[0], H, W), jnp.float32),
        jax.random.normal(k2, (B, embed_dim[1], H, W), jnp.float32),
    ]

    decoder = MLPDecoderPallas(embed_dim, key=kp)
    out = jax.block_until_ready(decoder(x))

    ref = _reference(x, decoder)
    assert out.shape == (B, embed_dim[-1], H, W), out.shape
    assert jnp.allclose(out, ref, atol=1e-4, rtol=1e-4), \
        float(jnp.max(jnp.abs(out - ref)))

    print("KERNEL_OK")
</pallas_src>

<mosaic_0001>
module attributes {stable_mosaic.version = 11 : i64} {
  func.func @_mlp_decoder_kernel(%arg0: i32, %arg1: i32, %arg2: memref<16x4xbf16, #tpu.memory_space<vmem>>, %arg3: memref<16x4xbf16, #tpu.memory_space<vmem>>, %arg4: memref<16x1xf32, #tpu.memory_space<vmem>>, %arg5: memref<1x4x256xf32, #tpu.memory_space<vmem>>, %arg6: memref<1x4x256xf32, #tpu.memory_space<vmem>>, %arg7: memref<1x16x256xf32, #tpu.memory_space<vmem>>, %arg8: memref<16x256xf32, #tpu.memory_space<vmem>>) attributes {dimension_semantics = [#tpu.dimension_semantics<parallel>, #tpu.dimension_semantics<parallel>], iteration_bounds = array<i64: 2, 1>, scalar_prefetch = 0 : i64, scratch_operands = 1 : i64, tpu.core_type = #tpu.core_type<tc>, window_params = [{pipeline_mode = #tpu.pipeline_mode<synchronous>, transform_indices = @transform_0, window_bounds = array<i64: 16, 4>}, {pipeline_mode = #tpu.pipeline_mode<synchronous>, transform_indices = @transform_1, window_bounds = array<i64: 16, 4>}, {pipeline_mode = #tpu.pipeline_mode<synchronous>, transform_indices = @transform_2, window_bounds = array<i64: 16, 1>}, {transform_indices = @transform_3, window_bounds = array<i64: 1, 4, 256>}, {transform_indices = @transform_4, window_bounds = array<i64: 1, 4, 256>}, {transform_indices = @transform_5, window_bounds = array<i64: 1, 16, 256>}]} {
    %c0 = arith.constant 0 : index
    %c0_0 = arith.constant 0 : index
    %0 = vector.load %arg2[%c0, %c0_0] : memref<16x4xbf16, #tpu.memory_space<vmem>>, vector<16x4xbf16>
    %c0_1 = arith.constant 0 : index
    %c0_2 = arith.constant 0 : index
    %c0_3 = arith.constant 0 : index
    %1 = vector.load %arg5[%c0_1, %c0_2, %c0_3] : memref<1x4x256xf32, #tpu.memory_space<vmem>>, vector<1x4x256xf32>
    %2 = vector.shape_cast %1 : vector<1x4x256xf32> to vector<4x256xf32>
    %3 = arith.truncf %2 : vector<4x256xf32> to vector<4x256xbf16>
    %cst = arith.constant dense<0.000000e+00> : vector<16x256xf32>
    %4 = tpu.matmul %0, %3, %cst {dimension_numbers = #tpu.dot_dimension_numbers<[1], [0], [0], [1], [0, 0, 1, 1], [], []>} : vector<16x4xbf16>, vector<4x256xbf16>, vector<16x256xf32> -> vector<16x256xf32>
    %c0_4 = arith.constant 0 : index
    %c0_5 = arith.constant 0 : index
    %5 = vector.load %arg8[%c0_4, %c0_5] : memref<16x256xf32, #tpu.memory_space<vmem>>, vector<16x256xf32>
    tpu.vector_store %arg8[%c0_4, %c0_5], %4 {strides = array<i32>} : memref<16x256xf32, #tpu.memory_space<vmem>>, vector<16x256xf32>,
    %c0_6 = arith.constant 0 : index
    %c0_7 = arith.constant 0 : index
    %6 = vector.load %arg8[%c0_6, %c0_7] : memref<16x256xf32, #tpu.memory_space<vmem>>, vector<16x256xf32>
    %c0_8 = arith.constant 0 : index
    %c0_9 = arith.constant 0 : index
    %7 = vector.load %arg3[%c0_8, %c0_9] : memref<16x4xbf16, #tpu.memory_space<vmem>>, vector<16x4xbf16>
    %c0_10 = arith.constant 0 : index
    %c0_11 = arith.constant 0 : index
    %c0_12 = arith.constant 0 : index
    %8 = vector.load %arg6[%c0_10, %c0_11, %c0_12] : memref<1x4x256xf32, #tpu.memory_space<vmem>>, vector<1x4x256xf32>
    %9 = vector.shape_cast %8 : vector<1x4x256xf32> to vector<4x256xf32>
    %10 = arith.truncf %9 : vector<4x256xf32> to vector<4x256xbf16>
    %cst_13 = arith.constant dense<0.000000e+00> : vector<16x256xf32>
    %11 = tpu.matmul %7, %10, %cst_13 {dimension_numbers = #tpu.dot_dimension_numbers<[1], [0], [0], [1], [0, 0, 1, 1], [], []>} : vector<16x4xbf16>, vector<4x256xbf16>, vector<16x256xf32> -> vector<16x256xf32>
    %12 = arith.addf %6, %11 : vector<16x256xf32>
    %c0_14 = arith.constant 0 : index
    %c0_15 = arith.constant 0 : index
    %13 = vector.load %arg8[%c0_14, %c0_15] : memref<16x256xf32, #tpu.memory_space<vmem>>, vector<16x256xf32>
    tpu.vector_store %arg8[%c0_14, %c0_15], %12 {strides = array<i32>} : memref<16x256xf32, #tpu.memory_space<vmem>>, vector<16x256xf32>,
    %c0_16 = arith.constant 0 : index
    %c0_17 = arith.constant 0 : index
    %14 = vector.load %arg8[%c0_16, %c0_17] : memref<16x256xf32, #tpu.memory_space<vmem>>, vector<16x256xf32>
    %c0_18 = arith.constant 0 : index
    %c0_19 = arith.constant 0 : index
    %15 = vector.load %arg4[%c0_18, %c0_19] : memref<16x1xf32, #tpu.memory_space<vmem>>, vector<16x1xf32>
    %16 = vector.broadcast %15 : vector<16x1xf32> to vector<16x256xf32>
    %17 = arith.addf %14, %16 : vector<16x256xf32>
    %cst_20 = arith.constant 0.000000e+00 : f32
    %18 = vector.broadcast %cst_20 : f32 to vector<16x256xf32>
    %19 = arith.maximumf %17, %18 : vector<16x256xf32>
    %c0_21 = arith.constant 0 : index
    %c0_22 = arith.constant 0 : index
    %c0_23 = arith.constant 0 : index
    %20 = vector.load %arg7[%c0_21, %c0_22, %c0_23] : memref<1x16x256xf32, #tpu.memory_space<vmem>>, vector<1x16x256xf32>
    %21 = vector.shape_cast %20 : vector<1x16x256xf32> to vector<16x256xf32>
    %22 = vector.shape_cast %19 : vector<16x256xf32> to vector<1x16x256xf32>
    tpu.vector_store %arg7[%c0_21, %c0_22, %c0_23], %22 {strides = array<i32>} : memref<1x16x256xf32, #tpu.memory_space<vmem>>, vector<1x16x256xf32>,
    return
  }
  func.func @transform_0(%arg0: i32, %arg1: i32) -> (i32, i32) {
    %c0_i32 = arith.constant 0 : i32
    %c0_i32_0 = arith.constant 0 : i32
    %c0_i32_1 = arith.constant 0 : i32
    return %c0_i32, %c0_i32_0 : i32, i32
  }
  func.func @transform_1(%arg0: i32, %arg1: i32) -> (i32, i32) {
    %c0_i32 = arith.constant 0 : i32
    %c0_i32_0 = arith.constant 0 : i32
    %c0_i32_1 = arith.constant 0 : i32
    return %c0_i32, %c0_i32_0 : i32, i32
  }
  func.func @transform_2(%arg0: i32, %arg1: i32) -> (i32, i32) {
    %c0_i32 = arith.constant 0 : i32
    %c0_i32_0 = arith.constant 0 : i32
    %c0_i32_1 = arith.constant 0 : i32
    return %c0_i32, %c0_i32_0 : i32, i32
  }
  func.func @transform_3(%arg0: i32, %arg1: i32) -> (i32, i32, i32) {
    %c0_i32 = arith.constant 0 : i32
    %c0_i32_0 = arith.constant 0 : i32
    return %arg0, %c0_i32, %arg1 : i32, i32, i32
  }
  func.func @transform_4(%arg0: i32, %arg1: i32) -> (i32, i32, i32) {
    %c0_i32 = arith.constant 0 : i32
    %c0_i32_0 = arith.constant 0 : i32
    return %arg0, %c0_i32, %arg1 : i32, i32, i32
  }
  func.func @transform_5(%arg0: i32, %arg1: i32) -> (i32, i32, i32) {
    %c0_i32 = arith.constant 0 : i32
    %c0_i32_0 = arith.constant 0 : i32
    return %arg0, %c0_i32, %arg1 : i32, i32, i32
  }
}

</mosaic_0001>

<llo_original>
// kernel: tpu_custom_call.1
$region0: #{tpu_custom_call.1}
  #allocation0 [shape = 'u32[]', space=smem, size = 0x4, offset = 0x4, fixed_abs, tag = 'smem constant byte address 0x4 - core index']
  #allocation1 [shape = 'u32[144,128]{1,0:T(1,128)}', space=vmem, size = 0x12000, scoped, tag = 'internal scratch']
  #allocation2 [shape = 'f32[16,256]{1,0:T(8,128)}', space=vmem, size = 0x4000, scoped, tag = 'scratch operand']
  %s0 = inlined_call_operand.vmem [shape: bf16[16,4], index: 0, kind: input, shape index: {}]
  %s1 = inlined_call_operand.vmem [shape: bf16[16,4], index: 1, kind: input, shape index: {}]
  %s2 = inlined_call_operand.vmem [shape: f32[16,1], index: 2, kind: input, shape index: {}]
  %s3 = inlined_call_operand.vmem [shape: f32[2,4,256], index: 3, kind: input, shape index: {}]
  %s4 = inlined_call_operand.vmem [shape: f32[2,4,256], index: 4, kind: input, shape index: {}]
  %s5 = inlined_call_operand.hbm [shape: f32[2,16,256], index: 5, kind: output, shape index: {}]
  %s6 = sld [smem:[#allocation0]]
  $region53: #{tpu_custom_call.1} parent=0
    _
  %s8 = ssub.s32 1, %s6
  %s9 = scalar_select 0, %s8, %s6
  $region1: #{tpu_custom_call.1} parent=0
    #allocation3 [shape = 'u8[32768]{0}', space=vmem, size = 0x8000, scoped, tag = 'output window, operand 0']
    #allocation4 [shape = 's32[2]{0}', space=sflag, size = 0x8, scoped, tag = 'scoped memory for tpu_custom_call.1']
    %10 = vsyncpa [#allocation4], 0
    %s11 = scalar_lea.sflag [#allocation4], 1
    %12 = vsyncpa %s11, 0
    loop: start=0, step=1, limit=4
    $region2: #{tpu_custom_call.1} parent=1 // loop_pre_header
      _
    $region3: #{tpu_custom_call.1} parent=1 // loop_header
      %s14 = sphi 0, %s18
      %p15 = scmp.ge.s32.totalorder %s14, 4
      %s21 = sphi 0, %s33
      %s22 = sphi 0, %s29
      %s23 = sphi 0, %s21
      %s24 = sphi 0, %s22
      %s25 = sphi 0, %s23
      %s26 = sphi 0, %s24
      %s34 = sphi 0, %s34
      %s36 = sphi 0, %s34
      %s37 = sphi 0, %s36
      %s51 = sphi 0, %s37
      %s55 = sphi 0, %s55
      %s57 = sphi 0, %s55
      %s58 = sphi 0, %s57
      %s72 = sphi 0, %s58
      %s76 = sphi 0, %s76
      %s78 = sphi 0, %s76
      %s79 = sphi 0, %s78
      %s93 = sphi 0, %s79
      %s101 = sphi 0, %s103
      %s104 = sphi 0, %s101
      %s105 = sphi 0, %s104
      %s121 = sphi 0, %s105
      %s129 = sphi 0, %s131
      %s132 = sphi 0, %s129
      %s133 = sphi 0, %s132
      %s149 = sphi 0, %s133
      %s157 = sphi 0, %s159
      %s160 = sphi 0, %s157
      %s161 = sphi 0, %s160
      %s177 = sphi 0, %s161
    $region4: #{tpu_custom_call.1} parent=1 // loop_header_branch
      %17 = sbr.rel (%p15) target = $region8
    $region5: #{tpu_custom_call.1} parent=1 // loop_body
      %s19 = ssub.s32 %s14, 1
      %s20 = ssub.s32 %s14, 2
      %s27 = sadd.s32 1, %s22
      %p28 = scmp.ge.s32.totalorder %s27, 1
      %s29 = scalar_select %p28, 0, %s27
      %s30 = sadd.s32 1, %s21
      %s31 = scalar_select %p28, %s30, %s21
      %p32 = scmp.ge.s32.totalorder %s31, 2
      %s33 = scalar_select %p32, 0, %s31
      %s35 = sadd.s32 %s34, 1
      %p38 = scmp.eq.s32.totalorder %s14, 1
      %p39 = scmp.ne.s32.totalorder %s34, %s36
      %p40 = scmp.eq.s32.totalorder %s14, 0
      %p41 = por %p39, %p40
      %p42 = scmp.ne.s32.totalorder %s34, %s36
      %p43 = scmp.eq.s32.totalorder %s19, 1
      %p44 = por %p42, %p43
      %p45 = scmp.ne.s32.totalorder %s36, %s37
      %p46 = scmp.eq.s32.totalorder %s19, 0
      %p47 = por %p45, %p46
      %p48 = scmp.ne.s32.totalorder %s36, %s37
      %p49 = scmp.eq.s32.totalorder %s20, 1
      %p50 = por %p48, %p49
      %p52 = scmp.ne.s32.totalorder %s37, %s51
      %p53 = scmp.eq.s32.totalorder %s20, 0
      %p54 = por %p52, %p53
      %s56 = sadd.s32 %s55, 1
      %p59 = scmp.eq.s32.totalorder %s14, 1
      %p60 = scmp.ne.s32.totalorder %s55, %s57
      %p61 = scmp.eq.s32.totalorder %s14, 0
      %p62 = por %p60, %p61
      %p63 = scmp.ne.s32.totalorder %s55, %s57
      %p64 = scmp.eq.s32.totalorder %s19, 1
      %p65 = por %p63, %p64
      %p66 = scmp.ne.s32.totalorder %s57, %s58
      %p67 = scmp.eq.s32.totalorder %s19, 0
      %p68 = por %p66, %p67
      %p69 = scmp.ne.s32.totalorder %s57, %s58
      %p70 = scmp.eq.s32.totalorder %s20, 1
      %p71 = por %p69, %p70
      %p73 = scmp.ne.s32.totalorder %s58, %s72
      %p74 = scmp.eq.s32.totalorder %s20, 0
      %p75 = por %p73, %p74
      %s77 = sadd.s32 %s76, 1
      %p80 = scmp.eq.s32.totalorder %s14, 1
      %p81 = scmp.ne.s32.totalorder %s76, %s78
      %p82 = scmp.eq.s32.totalorder %s14, 0
      %p83 = por %p81, %p82
      %p84 = scmp.ne.s32.totalorder %s76, %s78
      %p85 = scmp.eq.s32.totalorder %s19, 1
      %p86 = por %p84, %p85
      %p87 = scmp.ne.s32.totalorder %s78, %s79
      %p88 = scmp.eq.s32.totalorder %s19, 0
      %p89 = por %p87, %p88
      %p90 = scmp.ne.s32.totalorder %s78, %s79
      %p91 = scmp.eq.s32.totalorder %s20, 1
      %p92 = por %p90, %p91
      %p94 = scmp.ne.s32.totalorder %s79, %s93
      %p95 = scmp.eq.s32.totalorder %s20, 0
      %p96 = por %p94, %p95
      %s97 = ssub.s32 %s21, %s33
      %s98 = ssub.s32 %s22, %s29
      %s99 = sor.u32 %s97, %s98
      %p100 = scmp.eq.s32.totalorder %s99, 0
      %s102 = sadd.s32 %s101, 1
      %s103 = scalar_select %p100, %s101, %s102
      %p106 = pneg %p100
      %p107 = scmp.eq.s32.totalorder %s14, 1
      %p108 = por %p106, %p107
      %p109 = scmp.ne.s32.totalorder %s101, %s104
      %p110 = scmp.eq.s32.totalorder %s14, 0
      %p111 = por %p109, %p110
      %p112 = scmp.ne.s32.totalorder %s101, %s104
      %p113 = scmp.eq.s32.totalorder %s19, 1
      %p114 = por %p112, %p113
      %p115 = scmp.ne.s32.totalorder %s104, %s105
      %p116 = scmp.eq.s32.totalorder %s19, 0
      %p117 = por %p115, %p116
      %p118 = scmp.ne.s32.totalorder %s104, %s105
      %p119 = scmp.eq.s32.totalorder %s20, 1
      %p120 = por %p118, %p119
      %p122 = scmp.ne.s32.totalorder %s105, %s121
      %p123 = scmp.eq.s32.totalorder %s20, 0
      %p124 = por %p122, %p123
      %s125 = ssub.s32 %s21, %s33
      %s126 = ssub.s32 %s22, %s29
      %s127 = sor.u32 %s125, %s126
      %p128 = scmp.eq.s32.totalorder %s127, 0
      %s130 = sadd.s32 %s129, 1
      %s131 = scalar_select %p128, %s129, %s130
      %p134 = pneg %p128
      %p135 = scmp.eq.s32.totalorder %s14, 1
      %p136 = por %p134, %p135
      %p137 = scmp.ne.s32.totalorder %s129, %s132
      %p138 = scmp.eq.s32.totalorder %s14, 0
      %p139 = por %p137, %p138
      %p140 = scmp.ne.s32.totalorder %s129, %s132
      %p141 = scmp.eq.s32.totalorder %s19, 1
      %p142 = por %p140, %p141
      %p143 = scmp.ne.s32.totalorder %s132, %s133
      %p144 = scmp.eq.s32.totalorder %s19, 0
      %p145 = por %p143, %p144
      %p146 = scmp.ne.s32.totalorder %s132, %s133
      %p147 = scmp.eq.s32.totalorder %s20, 1
      %p148 = por %p146, %p147
      %p150 = scmp.ne.s32.totalorder %s133, %s149
      %p151 = scmp.eq.s32.totalorder %s20, 0
      %p152 = por %p150, %p151
      %s153 = ssub.s32 %s21, %s33
      %s154 = ssub.s32 %s22, %s29
      %s155 = sor.u32 %s153, %s154
      %p156 = scmp.eq.s32.totalorder %s155, 0
      %s158 = sadd.s32 %s157, 1
      %s159 = scalar_select %p156, %s157, %s158
      %p162 = pneg %p156
      %p163 = scmp.eq.s32.totalorder %s14, 1
      %p164 = por %p162, %p163
      %p165 = scmp.ne.s32.totalorder %s157, %s160
      %p166 = scmp.eq.s32.totalorder %s14, 0
      %p167 = por %p165, %p166
      %p168 = scmp.ne.s32.totalorder %s157, %s160
      %p169 = scmp.eq.s32.totalorder %s19, 1
      %p170 = por %p168, %p169
      %p171 = scmp.ne.s32.totalorder %s160, %s161
      %p172 = scmp.eq.s32.totalorder %s19, 0
      %p173 = por %p171, %p172
      %p174 = scmp.ne.s32.totalorder %s160, %s161
      %p175 = scmp.eq.s32.totalorder %s20, 1
      %p176 = por %p174, %p175
      %p178 = scmp.ne.s32.totalorder %s161, %s177
      %p179 = scmp.eq.s32.totalorder %s20, 0
      %p180 = por %p178, %p179
      %p181 = scmp.le.s32.totalorder 1, %s14
      %p182 = scmp.lt.s32.totalorder %s14, 3
      %p183 = pnand %p181, %p182
      %p184 = pneg %p183
      // Predicated region
      $region9: #{tpu_custom_call.1} parent=5 // pred_check
        _
      $region10: #{tpu_custom_call.1} parent=5 // pred_check_branch
        %186 = sbr.rel (%p183) target = $region12
      $region11: #{tpu_custom_call.1} parent=5 // pred_region
        %s187 = ssub.s32 %s14, 1
        // Predicated region
        $region13: #{tpu_custom_call.1} parent=11 // pred_check
          %p188 = pneg %p47
        $region14: #{tpu_custom_call.1} parent=11 // pred_check_branch
          %190 = sbr.rel (%p188) target = $region16
        $region15: #{tpu_custom_call.1} parent=11 // pred_region
          _
        $region16: #{tpu_custom_call.1} parent=11 // pred_fallthru
          _
        // Predicated region
        $region17: #{tpu_custom_call.1} parent=11 // pred_check
          %p191 = pneg %p68
        $region18: #{tpu_custom_call.1} parent=11 // pred_check_branch
          %193 = sbr.rel (%p191) target = $region20
        $region19: #{tpu_custom_call.1} parent=11 // pred_region
          _
        $region20: #{tpu_custom_call.1} parent=11 // pred_fallthru
          _
        // Predicated region
        $region21: #{tpu_custom_call.1} parent=11 // pred_check
          %p194 = pneg %p89
        $region22: #{tpu_custom_call.1} parent=11 // pred_check_branch
          %196 = sbr.rel (%p194) target = $region24
        $region23: #{tpu_custom_call.1} parent=11 // pred_region
          _
        $region24: #{tpu_custom_call.1} parent=11 // pred_fallthru
          _
      $region12: #{tpu_custom_call.1} parent=5 // pred_fallthru
        _
      %p197 = scmp.lt.s32.totalorder %s14, 2
      // Predicated region
      $region25: #{tpu_custom_call.1} parent=5 // pred_check
        %p198 = pneg %p197
      $region26: #{tpu_custom_call.1} parent=5 // pred_check_branch
        %200 = sbr.rel (%p198) target = $region28
      $region27: #{tpu_custom_call.1} parent=5 // pred_region
        // Predicated region
        $region29: #{tpu_custom_call.1} parent=27 // pred_check
          %p201 = pneg %p111
        $region30: #{tpu_custom_call.1} parent=27 // pred_check_branch
          %203 = sbr.rel (%p201) target = $region32
        $region31: #{tpu_custom_call.1} parent=27 // pred_region
          %s204 = smul.u32 2, %s22
          %p205 = scmp.lt.s32.totalorder %s21, 1
          %s206 = scalar_select %p205, %s21, 1
          %p207 = scmp.lt.s32.totalorder %s204, 1
          %s208 = scalar_select %p207, %s204, 1
          %s209 = smul.addr %s206, 2
          %s210 = sadd.s32 %s208, %s209
          %s211 = smul.addr %s210, 4
          %s212 = scalar_lea.vmem %s3, %s211
          %s213 = smul.u32 2, %s22
        $region32: #{tpu_custom_call.1} parent=27 // pred_fallthru
          _
        // Predicated region
        $region33: #{tpu_custom_call.1} parent=27 // pred_check
          %p214 = pneg %p139
        $region34: #{tpu_custom_call.1} parent=27 // pred_check_branch
          %216 = sbr.rel (%p214) target = $region36
        $region35: #{tpu_custom_call.1} parent=27 // pred_region
          %s217 = smul.u32 2, %s22
          %p218 = scmp.lt.s32.totalorder %s21, 1
          %s219 = scalar_select %p218, %s21, 1
          %p220 = scmp.lt.s32.totalorder %s217, 1
          %s221 = scalar_select %p220, %s217, 1
          %s222 = smul.addr %s219, 2
          %s223 = sadd.s32 %s221, %s222
          %s224 = smul.addr %s223, 4
          %s225 = scalar_lea.vmem %s4, %s224
          %s226 = smul.u32 2, %s22
        $region36: #{tpu_custom_call.1} parent=27 // pred_fallthru
          _
      $region28: #{tpu_custom_call.1} parent=5 // pred_fallthru
        _
      %p227 = scmp.le.s32.totalorder 1, %s14
      %p228 = scmp.lt.s32.totalorder %s14, 3
      %p229 = pnand %p227, %p228
      %p230 = pneg %p229
      // Predicated region
      $region37: #{tpu_custom_call.1} parent=5 // pred_check
        _
      $region38: #{tpu_custom_call.1} parent=5 // pred_check_branch
        %232 = sbr.rel (%p229) target = $region40
      $region39: #{tpu_custom_call.1} parent=5 // pred_region
        %s233 = ssub.s32 %s14, 1
        %p234 = pneg %p47
        %p235 = pneg %p44
        %p236 = pneg %p68
        %p237 = pneg %p65
        %p238 = pneg %p89
        %p239 = pneg %p86
        %s240 = smul.u32 2, %s24
        %p241 = scmp.lt.s32.totalorder %s23, 1
        %s242 = scalar_select %p241, %s23, 1
        %p243 = scmp.lt.s32.totalorder %s240, 1
        %s244 = scalar_select %p243, %s240, 1
        %s245 = smul.addr %s242, 2
        %s246 = sadd.s32 %s244, %s245
        %s247 = smul.addr %s246, 4
        %s248 = scalar_lea.vmem %s3, %s247
        %p249 = pneg %p117
        %p250 = pneg %p114
        %s251 = smul.u32 2, %s24
        %p252 = scmp.lt.s32.totalorder %s23, 1
        %s253 = scalar_select %p252, %s23, 1
        %p254 = scmp.lt.s32.totalorder %s251, 1
        %s255 = scalar_select %p254, %s251, 1
        %s256 = smul.addr %s253, 2
        %s257 = sadd.s32 %s255, %s256
        %s258 = smul.addr %s257, 4
        %s259 = scalar_lea.vmem %s4, %s258
        %p260 = pneg %p145
        %p261 = pneg %p142
        %p262 = pneg %p173
        %p263 = pneg %p170
        %s264 = sand.u32 %s160, 1
        %s265 = scalar_lea.sflag [#allocation4], %s264
        %s266 = sand.u32 %s160, 1
        %s267 = smul.addr %s266, 32
        %s268 = scalar_lea.vmem [#allocation3], %s267
        %s269 = smul.u32 2, %s24
        %p270 = scmp.lt.s32.totalorder %s23, 1
        %s271 = scalar_select %p270, %s23, 1
        %p272 = scmp.lt.s32.totalorder %s269, 1
        %s273 = scalar_select %p272, %s269, 1
        %s274 = smul.addr %s271, 2
        %s275 = sadd.s32 %s273, %s274
        %s276 = smul.addr %s275, 4
        %s277 = scalar_lea.vmem %s3, %s276
        %s278 = smul.u32 2, %s24
        %s279 = smul.u32 2, %s24
        %p280 = scmp.lt.s32.totalorder %s23, 1
        %s281 = scalar_select %p280, %s23, 1
        %p282 = scmp.lt.s32.totalorder %s279, 1
        %s283 = scalar_select %p282, %s279, 1
        %s284 = smul.addr %s281, 2
        %s285 = sadd.s32 %s283, %s284
        %s286 = smul.addr %s285, 4
        %s287 = scalar_lea.vmem %s4, %s286
        %s288 = smul.u32 2, %s24
        %s289 = smul.u32 2, %s24
        %v291 = vld [vmem:[%s0] sm:$0xf]
        %v292 = vld [vmem:[%s0 + $0x4] sm:$0xf]
        %v293 = vld [vmem:[%s277] sm:$0xff]
        %v295 = vcombine.high %v293, %v293
        %v297 = vpack.c.bf16 %v293, %v293
        %v298 = vpack.c.bf16 %v295, %v295
        %v301 = vunpack.c.l.b16 %v291
        %v302 = vunpack.c.l.b16 %v292
        %v303 = vpack.c.b16 %v302, %v301
        %vm304 = vcmask 31744
        %v306 = vsel %vm304, %v303, 0
        %vm308 = vcmask 1041408
        %v310 = vsel %vm308, %v297, 0
        %v313 = vsel %vm308, %v298, 0
        %315 = vmatprep.subr.bf16.mxu0 %v313
        %316 = vmatpush1.bf16.msra.mxu0 %v310
        %317 = vmatprep.subr.bf16.mxu0 0
        %318 = vmatpush1.bf16.msra.mxu0 0
        %319 = vmatprep.subr.bf16.mxu0 0
        %320 = vmatpush1.bf16.msra.mxu0 0
        %321 = vmatprep.subr.bf16.mxu0 0
        %322 = vmatpush1.bf16.msra.mxu0 0
        %323 = vmatprep.subr.bf16.mxu0 0
        %324 = vmatpush1.bf16.msra.mxu0 0
        %325 = vmatprep.subr.bf16.mxu0 0
        %326 = vmatpush1.bf16.msra.mxu0 0
        %327 = vmatprep.subr.bf16.mxu0 0
        %328 = vmatpush1.bf16.msra.mxu0 0
        %329 = vmatprep.subr.bf16.mxu0 0
        %330 = vmatpush1.bf16.msra.mxu0 0
        %331 = vmatprep.subr.bf16.mxu0 0
        %332 = vmatpush1.bf16.msra.mxu0 0
        %333 = vmatprep.subr.bf16.mxu0 0
        %334 = vmatpush1.bf16.msra.mxu0 0
        %335 = vmatprep.subr.bf16.mxu0 0
        %336 = vmatpush1.bf16.msra.mxu0 0
        %337 = vmatprep.subr.bf16.mxu0 0
        %338 = vmatpush1.bf16.msra.mxu0 0
        %339 = vmatprep.subr.bf16.mxu0 0
        %340 = vmatpush1.bf16.msra.mxu0 0
        %341 = vmatprep.subr.bf16.mxu0 0
        %342 = vmatpush1.bf16.msra.mxu0 0
        %343 = vmatprep.subr.bf16.mxu0 0
        %344 = vmatpush1.bf16.msra.mxu0 0
        %345 = vmatprep.subr.bf16.mxu0 0
        %346 = vmatpush1.bf16.msra.mxu0 0
        %347 = vmatprep.mubr.bf16.mxu0 0
        %348 = vmatmul.mubr.bf16.gmra.mrb[0].mxu0 %v306
        %v349 = vpop.f32.mrb[0].mxu0
        %v350 = vadd.f32 0.0, %v349
        %v351 = vpop.f32.mrb[0].mxu0
        %v352 = vadd.f32 0.0, %v351
        %v353 = vpop.f32.mrb[0].mxu0
        %v354 = vadd.f32 0.0, %v353
        %v355 = vpop.f32.mrb[0].mxu0
        %v356 = vadd.f32 0.0, %v355
        %357 = vdwg.mxu0
        %358 = vst [vmem:[#allocation2] sm:$0xff] %v350
        %359 = vst [vmem:[#allocation2 + $0x8] sm:$0xff] %v352
        %360 = vst [vmem:[#allocation2 + $0x10] sm:$0xff] %v354
        %361 = vst [vmem:[#allocation2 + $0x18] sm:$0xff] %v356
        %v362 = vld [vmem:[#allocation2] sm:$0xff]
        %v363 = vld [vmem:[#allocation2 + $0x8] sm:$0xff]
        %v364 = vld [vmem:[#allocation2 + $0x10] sm:$0xff]
        %v365 = vld [vmem:[#allocation2 + $0x18] sm:$0xff]
        %v366 = vld [vmem:[%s1] sm:$0xf]
        %v367 = vld [vmem:[%s1 + $0x4] sm:$0xf]
        %v368 = vld [vmem:[%s287] sm:$0xff]
        %v370 = vcombine.high %v368, %v368
        %v372 = vpack.c.bf16 %v368, %v368
        %v373 = vpack.c.bf16 %v370, %v370
        %v376 = vunpack.c.l.b16 %v366
        %v377 = vunpack.c.l.b16 %v367
        %v378 = vpack.c.b16 %v377, %v376
        %v380 = vsel %vm304, %v378, 0
        %v383 = vsel %vm308, %v372, 0
        %v386 = vsel %vm308, %v373, 0
        %388 = vmatprep.subr.bf16.mxu0 %v386
        %389 = vmatpush1.bf16.msra.mxu0 %v383
        %390 = vmatprep.subr.bf16.mxu0 0
        %391 = vmatpush1.bf16.msra.mxu0 0
        %392 = vmatprep.subr.bf16.mxu0 0
        %393 = vmatpush1.bf16.msra.mxu0 0
        %394 = vmatprep.subr.bf16.mxu0 0
        %395 = vmatpush1.bf16.msra.mxu0 0
        %396 = vmatprep.subr.bf16.mxu0 0
        %397 = vmatpush1.bf16.msra.mxu0 0
        %398 = vmatprep.subr.bf16.mxu0 0
        %399 = vmatpush1.bf16.msra.mxu0 0
        %400 = vmatprep.subr.bf16.mxu0 0
        %401 = vmatpush1.bf16.msra.mxu0 0
        %402 = vmatprep.subr.bf16.mxu0 0
        %403 = vmatpush1.bf16.msra.mxu0 0
        %404 = vmatprep.subr.bf16.mxu0 0
        %405 = vmatpush1.bf16.msra.mxu0 0
        %406 = vmatprep.subr.bf16.mxu0 0
        %407 = vmatpush1.bf16.msra.mxu0 0
        %408 = vmatprep.subr.bf16.mxu0 0
        %409 = vmatpush1.bf16.msra.mxu0 0
        %410 = vmatprep.subr.bf16.mxu0 0
        %411 = vmatpush1.bf16.msra.mxu0 0
        %412 = vmatprep.subr.bf16.mxu0 0
        %413 = vmatpush1.bf16.msra.mxu0 0
        %414 = vmatprep.subr.bf16.mxu0 0
        %415 = vmatpush1.bf16.msra.mxu0 0
        %416 = vmatprep.subr.bf16.mxu0 0
        %417 = vmatpush1.bf16.msra.mxu0 0
        %418 = vmatprep.subr.bf16.mxu0 0
        %419 = vmatpush1.bf16.msra.mxu0 0
        %420 = vmatprep.mubr.bf16.mxu0 0
        %421 = vmatmul.mubr.bf16.gmra.mrb[0].mxu0 %v380
        %v422 = vpop.f32.mrb[0].mxu0
        %v423 = vadd.f32 0.0, %v422
        %v424 = vpop.f32.mrb[0].mxu0
        %v425 = vadd.f32 0.0, %v424
        %v426 = vpop.f32.mrb[0].mxu0
        %v427 = vadd.f32 0.0, %v426
        %v428 = vpop.f32.mrb[0].mxu0
        %v429 = vadd.f32 0.0, %v428
        %430 = vdwg.mxu0
        %v431 = vadd.f32 %v362, %v423
        %v432 = vadd.f32 %v363, %v425
        %v433 = vadd.f32 %v364, %v427
        %v434 = vadd.f32 %v365, %v429
        %435 = vst [vmem:[#allocation2] sm:$0xff] %v431
        %436 = vst [vmem:[#allocation2 + $0x8] sm:$0xff] %v432
        %437 = vst [vmem:[#allocation2 + $0x10] sm:$0xff] %v433
        %438 = vst [vmem:[#allocation2 + $0x18] sm:$0xff] %v434
        %v439 = vld [vmem:[#allocation2] sm:$0xff]
        %v440 = vld [vmem:[#allocation2 + $0x8] sm:$0xff]
        %v441 = vld [vmem:[#allocation2 + $0x10] sm:$0xff]
        %v442 = vld [vmem:[#allocation2 + $0x18] sm:$0xff]
        %v443 = vld [vmem:[%s2] sm:$0xff]
        %v444 = vld [vmem:[%s2 + $0x8] sm:$0xff]
        %446 = vset.pattern.permute.xlu0 0
        %447 = vperm.xlu0 %446, %v443
        %v448 = vpop.permute.xlu0 %447
        %451 = vset.pattern.permute.xlu0 0
        %452 = vperm.xlu0 %451, %v444
        %v453 = vpop.permute.xlu0 %452
        %v455 = vadd.f32 %v439, %v448
        %v456 = vadd.f32 %v440, %v448
        %v457 = vadd.f32 %v441, %v453
        %v458 = vadd.f32 %v442, %v453
        %v459 = vmax.f32 %v455, 0.0
        %v460 = vmax.f32 %v456, 0.0
        %v461 = vmax.f32 %v457, 0.0
        %v462 = vmax.f32 %v458, 0.0
        %463 = vst [vmem:[%s268] sm:$0xff] %v459
        %464 = vst [vmem:[%s268 + $0x8] sm:$0xff] %v460
        %465 = vst [vmem:[%s268 + $0x10] sm:$0xff] %v461
        %466 = vst [vmem:[%s268 + $0x18] sm:$0xff] %v462
        %s467 = sand.u32 %s160, 1
        %s468 = scalar_lea.sflag [#allocation4], %s467
        %s469 = sand.u32 %s160, 1
        %s470 = smul.addr %s469, 32
        %s471 = scalar_lea.vmem [#allocation3], %s470
        // Predicated region
        $region41: #{tpu_custom_call.1} parent=39 // pred_check
          %p472 = pneg %p170
        $region42: #{tpu_custom_call.1} parent=39 // pred_check_branch
          %474 = sbr.rel (%p472) target = $region44
        $region43: #{tpu_custom_call.1} parent=39 // pred_region
          %s475 = smul.u32 2, %s24
          %s477 = ssub.s32 512, 512
          %478 = vsyncadd %s468, %s477
          %s479 = smul.addr %s23, 4
          %s480 = sadd.s32 %s475, %s479
          %s481 = smul.addr %s480, 128
          %s482 = scalar_lea.hbm %s5, %s481
          %s483 = sshll.u32 %s471, 4
          %s484 = int_to_ptr.vmem [resolvable:$true] %s483
          %489 = dma.vmem_to_hbm [thread:$0]  %s484, 512, %s482, %s468, 256, 256, 16
        $region44: #{tpu_custom_call.1} parent=39 // pred_fallthru
          _
      $region40: #{tpu_custom_call.1} parent=5 // pred_fallthru
        _
      %p490 = scmp.le.s32.totalorder 2, %s14
      // Predicated region
      $region45: #{tpu_custom_call.1} parent=5 // pred_check
        %p491 = pneg %p490
      $region46: #{tpu_custom_call.1} parent=5 // pred_check_branch
        %493 = sbr.rel (%p491) target = $region48
      $region47: #{tpu_custom_call.1} parent=5 // pred_region
        %s494 = ssub.s32 %s14, 2
        // Predicated region
        $region49: #{tpu_custom_call.1} parent=47 // pred_check
          %p495 = pneg %p176
        $region50: #{tpu_custom_call.1} parent=47 // pred_check_branch
          %497 = sbr.rel (%p495) target = $region52
        $region51: #{tpu_custom_call.1} parent=47 // pred_region
          %s498 = sand.u32 %s161, 1
          %s499 = scalar_lea.sflag [#allocation4], %s498
          %s500 = sand.u32 %s161, 1
          %s501 = smul.addr %s500, 32
          %s502 = scalar_lea.vmem [#allocation3], %s501
          %503 = dma.done %s499, 512
        $region52: #{tpu_custom_call.1} parent=47 // pred_fallthru
          _
      $region48: #{tpu_custom_call.1} parent=5 // pred_fallthru
        _
    $region6: #{tpu_custom_call.1} parent=1 // loop_footer
      %s18 = sadd.s32 1, %s14
    $region7: #{tpu_custom_call.1} parent=1 // loop_footer_branch
      %13 = sbr.rel target = $region3
    $region8: #{tpu_custom_call.1} parent=1 // loop_exit
      _
    %504 = vsyncpa [#allocation4], 1
    %s505 = scalar_lea.sflag [#allocation4], 1
    %506 = vsyncpa %s505, 1

</llo_original>
